<compile_context>
chip_gen: v7x
topology: tpu7x:2x2x1
jax: 0.10.0
libtpu: 0.0.40
codegen_flags: <defaults>
</compile_context>

<pallas_src>
import jax
import jax.numpy as jnp
from jax import lax
from jax.experimental import pallas as pl
from jax.experimental.pallas import tpu as pltpu

numInputs = 9
layer1Nodes = 4
layer2Nodes = 5
numOutputs = 1
NEG_SLOPE = 0.01  # nn.LeakyReLU() default

SUBLANES = 8
CHUNK_L = 256                    # lanes per inner step -> (8,256) = 2 vregs/slab
SUPER = SUBLANES * CHUNK_L       # 2048-sample granularity for tiles / padding
MAX_TILE_B = 131072              # <= ~10.5 MB double-buffered VMEM (v7x-safe)
TARGET_TILES = 4                 # >=4 grid steps: feeds both v7x TCs + pipeline


def _cdiv(a, b):
    return -(-a // b)


def _round_up(a, b):
    return _cdiv(a, b) * b


def _choose_tiling(batch, max_tile_b=MAX_TILE_B):
    """Pick (tile_b, n_tiles, b_pad): big tiles, bounded padding, >=4 tiles."""
    b_lane = _round_up(max(batch, 1), SUPER)
    n_tiles = max(TARGET_TILES, _cdiv(b_lane, max_tile_b))
    tile_b = max(SUPER, min(_round_up(_cdiv(b_lane, n_tiles), SUPER), max_tile_b))
    n_tiles = _cdiv(b_lane, tile_b)
    return tile_b, n_tiles, n_tiles * tile_b


def _leaky_relu(x):
    # Bitwise-identical to where(x>=0, x, 0.01*x) for slope in (0,1); 2 VALU ops.
    return jnp.maximum(x, NEG_SLOPE * x)


def mlp_kernel(w1_ref, b1_ref, w2_ref, b2_ref, w3_ref, b3_ref, x_ref, o_ref):
    """One batch tile of the MLP.

    x_ref : (numInputs, 1, 8, L) f32 VMEM block (feature-major, packed slabs).
    o_ref : (numOutputs, 1, 8, L) f32 VMEM block.
    w*/b* : flattened f32 params resident in SMEM (w indexed j*out + k).
    """
    L = x_ref.shape[-1]
    n_chunks = L // CHUNK_L

    # Hoist all scalar weight reads out of the chunk loop (loop-invariant).
    w1 = [[w1_ref[j * layer1Nodes + k] for k in range(layer1Nodes)]
          for j in range(numInputs)]
    b1 = [b1_ref[k] for k in range(layer1Nodes)]
    w2 = [[w2_ref[j * layer2Nodes + k] for k in range(layer2Nodes)]
          for j in range(layer1Nodes)]
    b2 = [b2_ref[k] for k in range(layer2Nodes)]
    w3 = [[w3_ref[j * numOutputs + k] for k in range(numOutputs)]
          for j in range(layer2Nodes)]
    b3 = [b3_ref[k] for k in range(numOutputs)]

    def chunk(c, carry):
        off = pl.multiple_of(c * CHUNK_L, CHUNK_L)

        # Per-feature (8, CHUNK_L) slabs: fully-packed vregs, all live in regs.
        xs = [x_ref[j, 0, :, pl.ds(off, CHUNK_L)] for j in range(numInputs)]

        # Layer 1: z1[k] = sum_j w1[j,k]*x[j] + b1[k]; a1 = leaky(z1)
        a1 = []
        for k in range(layer1Nodes):
            z = xs[0] * w1[0][k]
            for j in range(1, numInputs):
                z = z + xs[j] * w1[j][k]
            a1.append(_leaky_relu(z + b1[k]))

        # Layer 2
        a2 = []
        for k in range(layer2Nodes):
            z = a1[0] * w2[0][k]
            for j in range(1, layer1Nodes):
                z = z + a1[j] * w2[j][k]
            a2.append(_leaky_relu(z + b2[k]))

        # Layer 3 (no activation)
        for k in range(numOutputs):
            z = a2[0] * w3[0][k]
            for j in range(1, layer2Nodes):
                z = z + a2[j] * w3[j][k]
            o_ref[k, 0, :, pl.ds(off, CHUNK_L)] = (z + b3[k]).astype(o_ref.dtype)

        return carry

    lax.fori_loop(0, n_chunks, chunk, 0)


def mymodel_forward(x, params, max_tile_b=MAX_TILE_B):
    """x: (B, numInputs) f32. params: w1,b1,w2,b2,w3,b3 with w stored (in, out).

    Returns (B, numOutputs) f32, identical to torch's
    Linear -> LeakyReLU -> Linear -> LeakyReLU -> Linear.
    """
    B = x.shape[0]
    tile_b, n_tiles, b_pad = _choose_tiling(B, max_tile_b)
    L = tile_b // SUBLANES

    # Feature-major, padded only to n_tiles*tile_b (tile_b adapts to B, so
    # padding waste is bounded).  Pad -> transpose -> free contiguous reshape.
    x_f = x.astype(jnp.float32)
    x_p = jnp.pad(x_f, ((0, b_pad - B), (0, 0)))
    x_t = x_p.T.reshape(numInputs, n_tiles, SUBLANES, L)

    flat = lambda a: a.reshape(-1).astype(jnp.float32)
    w1, b1 = flat(params["w1"]), flat(params["b1"])
    w2, b2 = flat(params["w2"]), flat(params["b2"])
    w3, b3 = flat(params["w3"]), flat(params["b3"])

    smem = pl.BlockSpec(memory_space=pltpu.MemorySpace.SMEM)

    out4 = pl.pallas_call(
        mlp_kernel,
        out_shape=jax.ShapeDtypeStruct(
            (numOutputs, n_tiles, SUBLANES, L), jnp.float32),
        grid=(n_tiles,),
        in_specs=[smem, smem, smem, smem, smem, smem,                 # params
                  pl.BlockSpec((numInputs, 1, SUBLANES, L),
                               lambda i: (0, i, 0, 0))],              # x
        out_specs=pl.BlockSpec((numOutputs, 1, SUBLANES, L),
                               lambda i: (0, i, 0, 0)),
        compiler_params=pltpu.CompilerParams(
            dimension_semantics=("parallel",)),
    )(w1, b1, w2, b2, w3, b3, x_t)

    # (numOutputs, n_tiles, 8, L) -> (numOutputs, b_pad) -> (B, numOutputs).
    return out4.reshape(numOutputs, b_pad)[:, :B].T


def init_params(key):
    """Deterministic init mirroring nn.Linear shapes (stored as (in, out))."""
    ks = jax.random.split(key, 6)

    def linear(kw, kb, fan_in, fan_out):
        bound = 1.0 / jnp.sqrt(jnp.float32(fan_in))
        w = jax.random.uniform(kw, (fan_in, fan_out), jnp.float32, -bound, bound)
        b = jax.random.uniform(kb, (fan_out,), jnp.float32, -bound, bound)
        return w, b

    w1, b1 = linear(ks[0], ks[1], numInputs, layer1Nodes)
    w2, b2 = linear(ks[2], ks[3], layer1Nodes, layer2Nodes)
    w3, b3 = linear(ks[4], ks[5], layer2Nodes, numOutputs)
    return {"w1": w1, "b1": b1, "w2": w2, "b2": b2, "w3": w3, "b3": b3}


def reference_forward(x, p):
    a1 = jax.nn.leaky_relu(x @ p["w1"] + p["b1"], NEG_SLOPE)
    a2 = jax.nn.leaky_relu(a1 @ p["w2"] + p["b2"], NEG_SLOPE)
    return a2 @ p["w3"] + p["b3"]


if __name__ == "__main__":
    key = jax.random.PRNGKey(0)
    k_x, k_p = jax.random.split(key)
    params = init_params(k_p)

    # Small batch (single tile) and a multi-tile batch (exercises the grid,
    # adaptive tiling, and batch padding/slicing path).
    for batch in (8, 3000):
        xb = jax.random.normal(jax.random.fold_in(k_x, batch),
                               (batch, numInputs), dtype=jnp.float32)
        out = jax.block_until_ready(mymodel_forward(xb, params))
        ref = reference_forward(xb, params)
        assert out.shape == (batch, numOutputs)
        assert jnp.allclose(out, ref, atol=1e-5, rtol=1e-5)

    print("KERNEL_OK")
</pallas_src>

<mosaic_0001>
module attributes {stable_mosaic.version = 11 : i64} {
  func.func @mlp_kernel(%arg0: i32, %arg1: memref<36xf32, #tpu.memory_space<smem>>, %arg2: memref<4xf32, #tpu.memory_space<smem>>, %arg3: memref<20xf32, #tpu.memory_space<smem>>, %arg4: memref<5xf32, #tpu.memory_space<smem>>, %arg5: memref<5xf32, #tpu.memory_space<smem>>, %arg6: memref<1xf32, #tpu.memory_space<smem>>, %arg7: memref<9x1x8x256xf32, #tpu.memory_space<vmem>>, %arg8: memref<1x1x8x256xf32, #tpu.memory_space<vmem>>) attributes {dimension_semantics = [#tpu.dimension_semantics<parallel>], iteration_bounds = array<i64: 1>, scalar_prefetch = 0 : i64, scratch_operands = 0 : i64, tpu.core_type = #tpu.core_type<tc>, window_params = [{transform_indices = @transform_0, window_bounds = array<i64: 36>}, {transform_indices = @transform_1, window_bounds = array<i64: 4>}, {transform_indices = @transform_2, window_bounds = array<i64: 20>}, {transform_indices = @transform_3, window_bounds = array<i64: 5>}, {transform_indices = @transform_4, window_bounds = array<i64: 5>}, {transform_indices = @transform_5, window_bounds = array<i64: 1>}, {transform_indices = @transform_6, window_bounds = array<i64: 9, 1, 8, 256>}, {transform_indices = @transform_7, window_bounds = array<i64: 1, 1, 8, 256>}]} {
    %c0 = arith.constant 0 : index
    %0 = memref.load %arg1[%c0] : memref<36xf32, #tpu.memory_space<smem>>
    %c1 = arith.constant 1 : index
    %1 = memref.load %arg1[%c1] : memref<36xf32, #tpu.memory_space<smem>>
    %c2 = arith.constant 2 : index
    %2 = memref.load %arg1[%c2] : memref<36xf32, #tpu.memory_space<smem>>
    %c3 = arith.constant 3 : index
    %3 = memref.load %arg1[%c3] : memref<36xf32, #tpu.memory_space<smem>>
    %c4 = arith.constant 4 : index
    %4 = memref.load %arg1[%c4] : memref<36xf32, #tpu.memory_space<smem>>
    %c5 = arith.constant 5 : index
    %5 = memref.load %arg1[%c5] : memref<36xf32, #tpu.memory_space<smem>>
    %c6 = arith.constant 6 : index
    %6 = memref.load %arg1[%c6] : memref<36xf32, #tpu.memory_space<smem>>
    %c7 = arith.constant 7 : index
    %7 = memref.load %arg1[%c7] : memref<36xf32, #tpu.memory_space<smem>>
    %c8 = arith.constant 8 : index
    %8 = memref.load %arg1[%c8] : memref<36xf32, #tpu.memory_space<smem>>
    %c9 = arith.constant 9 : index
    %9 = memref.load %arg1[%c9] : memref<36xf32, #tpu.memory_space<smem>>
    %c10 = arith.constant 10 : index
    %10 = memref.load %arg1[%c10] : memref<36xf32, #tpu.memory_space<smem>>
    %c11 = arith.constant 11 : index
    %11 = memref.load %arg1[%c11] : memref<36xf32, #tpu.memory_space<smem>>
    %c12 = arith.constant 12 : index
    %12 = memref.load %arg1[%c12] : memref<36xf32, #tpu.memory_space<smem>>
    %c13 = arith.constant 13 : index
    %13 = memref.load %arg1[%c13] : memref<36xf32, #tpu.memory_space<smem>>
    %c14 = arith.constant 14 : index
    %14 = memref.load %arg1[%c14] : memref<36xf32, #tpu.memory_space<smem>>
    %c15 = arith.constant 15 : index
    %15 = memref.load %arg1[%c15] : memref<36xf32, #tpu.memory_space<smem>>
    %c16 = arith.constant 16 : index
    %16 = memref.load %arg1[%c16] : memref<36xf32, #tpu.memory_space<smem>>
    %c17 = arith.constant 17 : index
    %17 = memref.load %arg1[%c17] : memref<36xf32, #tpu.memory_space<smem>>
    %c18 = arith.constant 18 : index
    %18 = memref.load %arg1[%c18] : memref<36xf32, #tpu.memory_space<smem>>
    %c19 = arith.constant 19 : index
    %19 = memref.load %arg1[%c19] : memref<36xf32, #tpu.memory_space<smem>>
    %c20 = arith.constant 20 : index
    %20 = memref.load %arg1[%c20] : memref<36xf32, #tpu.memory_space<smem>>
    %c21 = arith.constant 21 : index
    %21 = memref.load %arg1[%c21] : memref<36xf32, #tpu.memory_space<smem>>
    %c22 = arith.constant 22 : index
    %22 = memref.load %arg1[%c22] : memref<36xf32, #tpu.memory_space<smem>>
    %c23 = arith.constant 23 : index
    %23 = memref.load %arg1[%c23] : memref<36xf32, #tpu.memory_space<smem>>
    %c24 = arith.constant 24 : index
    %24 = memref.load %arg1[%c24] : memref<36xf32, #tpu.memory_space<smem>>
    %c25 = arith.constant 25 : index
    %25 = memref.load %arg1[%c25] : memref<36xf32, #tpu.memory_space<smem>>
    %c26 = arith.constant 26 : index
    %26 = memref.load %arg1[%c26] : memref<36xf32, #tpu.memory_space<smem>>
    %c27 = arith.constant 27 : index
    %27 = memref.load %arg1[%c27] : memref<36xf32, #tpu.memory_space<smem>>
    %c28 = arith.constant 28 : index
    %28 = memref.load %arg1[%c28] : memref<36xf32, #tpu.memory_space<smem>>
    %c29 = arith.constant 29 : index
    %29 = memref.load %arg1[%c29] : memref<36xf32, #tpu.memory_space<smem>>
    %c30 = arith.constant 30 : index
    %30 = memref.load %arg1[%c30] : memref<36xf32, #tpu.memory_space<smem>>
    %c31 = arith.constant 31 : index
    %31 = memref.load %arg1[%c31] : memref<36xf32, #tpu.memory_space<smem>>
    %c32 = arith.constant 32 : index
    %32 = memref.load %arg1[%c32] : memref<36xf32, #tpu.memory_space<smem>>
    %c33 = arith.constant 33 : index
    %33 = memref.load %arg1[%c33] : memref<36xf32, #tpu.memory_space<smem>>
    %c34 = arith.constant 34 : index
    %34 = memref.load %arg1[%c34] : memref<36xf32, #tpu.memory_space<smem>>
    %c35 = arith.constant 35 : index
    %35 = memref.load %arg1[%c35] : memref<36xf32, #tpu.memory_space<smem>>
    %c0_0 = arith.constant 0 : index
    %36 = memref.load %arg2[%c0_0] : memref<4xf32, #tpu.memory_space<smem>>
    %c1_1 = arith.constant 1 : index
    %37 = memref.load %arg2[%c1_1] : memref<4xf32, #tpu.memory_space<smem>>
    %c2_2 = arith.constant 2 : index
    %38 = memref.load %arg2[%c2_2] : memref<4xf32, #tpu.memory_space<smem>>
    %c3_3 = arith.constant 3 : index
    %39 = memref.load %arg2[%c3_3] : memref<4xf32, #tpu.memory_space<smem>>
    %c0_4 = arith.constant 0 : index
    %40 = memref.load %arg3[%c0_4] : memref<20xf32, #tpu.memory_space<smem>>
    %c1_5 = arith.constant 1 : index
    %41 = memref.load %arg3[%c1_5] : memref<20xf32, #tpu.memory_space<smem>>
    %c2_6 = arith.constant 2 : index
    %42 = memref.load %arg3[%c2_6] : memref<20xf32, #tpu.memory_space<smem>>
    %c3_7 = arith.constant 3 : index
    %43 = memref.load %arg3[%c3_7] : memref<20xf32, #tpu.memory_space<smem>>
    %c4_8 = arith.constant 4 : index
    %44 = memref.load %arg3[%c4_8] : memref<20xf32, #tpu.memory_space<smem>>
    %c5_9 = arith.constant 5 : index
    %45 = memref.load %arg3[%c5_9] : memref<20xf32, #tpu.memory_space<smem>>
    %c6_10 = arith.constant 6 : index
    %46 = memref.load %arg3[%c6_10] : memref<20xf32, #tpu.memory_space<smem>>
    %c7_11 = arith.constant 7 : index
    %47 = memref.load %arg3[%c7_11] : memref<20xf32, #tpu.memory_space<smem>>
    %c8_12 = arith.constant 8 : index
    %48 = memref.load %arg3[%c8_12] : memref<20xf32, #tpu.memory_space<smem>>
    %c9_13 = arith.constant 9 : index
    %49 = memref.load %arg3[%c9_13] : memref<20xf32, #tpu.memory_space<smem>>
    %c10_14 = arith.constant 10 : index
    %50 = memref.load %arg3[%c10_14] : memref<20xf32, #tpu.memory_space<smem>>
    %c11_15 = arith.constant 11 : index
    %51 = memref.load %arg3[%c11_15] : memref<20xf32, #tpu.memory_space<smem>>
    %c12_16 = arith.constant 12 : index
    %52 = memref.load %arg3[%c12_16] : memref<20xf32, #tpu.memory_space<smem>>
    %c13_17 = arith.constant 13 : index
    %53 = memref.load %arg3[%c13_17] : memref<20xf32, #tpu.memory_space<smem>>
    %c14_18 = arith.constant 14 : index
    %54 = memref.load %arg3[%c14_18] : memref<20xf32, #tpu.memory_space<smem>>
    %c15_19 = arith.constant 15 : index
    %55 = memref.load %arg3[%c15_19] : memref<20xf32, #tpu.memory_space<smem>>
    %c16_20 = arith.constant 16 : index
    %56 = memref.load %arg3[%c16_20] : memref<20xf32, #tpu.memory_space<smem>>
    %c17_21 = arith.constant 17 : index
    %57 = memref.load %arg3[%c17_21] : memref<20xf32, #tpu.memory_space<smem>>
    %c18_22 = arith.constant 18 : index
    %58 = memref.load %arg3[%c18_22] : memref<20xf32, #tpu.memory_space<smem>>
    %c19_23 = arith.constant 19 : index
    %59 = memref.load %arg3[%c19_23] : memref<20xf32, #tpu.memory_space<smem>>
    %c0_24 = arith.constant 0 : index
    %60 = memref.load %arg4[%c0_24] : memref<5xf32, #tpu.memory_space<smem>>
    %c1_25 = arith.constant 1 : index
    %61 = memref.load %arg4[%c1_25] : memref<5xf32, #tpu.memory_space<smem>>
    %c2_26 = arith.constant 2 : index
    %62 = memref.load %arg4[%c2_26] : memref<5xf32, #tpu.memory_space<smem>>
    %c3_27 = arith.constant 3 : index
    %63 = memref.load %arg4[%c3_27] : memref<5xf32, #tpu.memory_space<smem>>
    %c4_28 = arith.constant 4 : index
    %64 = memref.load %arg4[%c4_28] : memref<5xf32, #tpu.memory_space<smem>>
    %c0_29 = arith.constant 0 : index
    %65 = memref.load %arg5[%c0_29] : memref<5xf32, #tpu.memory_space<smem>>
    %c1_30 = arith.constant 1 : index
    %66 = memref.load %arg5[%c1_30] : memref<5xf32, #tpu.memory_space<smem>>
    %c2_31 = arith.constant 2 : index
    %67 = memref.load %arg5[%c2_31] : memref<5xf32, #tpu.memory_space<smem>>
    %c3_32 = arith.constant 3 : index
    %68 = memref.load %arg5[%c3_32] : memref<5xf32, #tpu.memory_space<smem>>
    %c4_33 = arith.constant 4 : index
    %69 = memref.load %arg5[%c4_33] : memref<5xf32, #tpu.memory_space<smem>>
    %c0_34 = arith.constant 0 : index
    %70 = memref.load %arg6[%c0_34] : memref<1xf32, #tpu.memory_space<smem>>
    %c0_i32 = arith.constant 0 : i32
    %c256_i32 = arith.constant 256 : i32
    %71 = arith.muli %c0_i32, %c256_i32 : i32
    %72 = tpu.assume_multiple %71, 256 : i32
    %c0_35 = arith.constant 0 : index
    %c0_36 = arith.constant 0 : index
    %c0_37 = arith.constant 0 : index
    %73 = arith.index_cast %72 : i32 to index
    %74 = vector.load %arg7[%c0_35, %c0_36, %c0_37, %73] : memref<9x1x8x256xf32, #tpu.memory_space<vmem>>, vector<1x1x8x256xf32>
    %75 = vector.shape_cast %74 : vector<1x1x8x256xf32> to vector<8x256xf32>
    %c1_38 = arith.constant 1 : index
    %c0_39 = arith.constant 0 : index
    %c0_40 = arith.constant 0 : index
    %76 = arith.index_cast %72 : i32 to index
    %77 = vector.load %arg7[%c1_38, %c0_39, %c0_40, %76] : memref<9x1x8x256xf32, #tpu.memory_space<vmem>>, vector<1x1x8x256xf32>
    %78 = vector.shape_cast %77 : vector<1x1x8x256xf32> to vector<8x256xf32>
    %c2_41 = arith.constant 2 : index
    %c0_42 = arith.constant 0 : index
    %c0_43 = arith.constant 0 : index
    %79 = arith.index_cast %72 : i32 to index
    %80 = vector.load %arg7[%c2_41, %c0_42, %c0_43, %79] : memref<9x1x8x256xf32, #tpu.memory_space<vmem>>, vector<1x1x8x256xf32>
    %81 = vector.shape_cast %80 : vector<1x1x8x256xf32> to vector<8x256xf32>
    %c3_44 = arith.constant 3 : index
    %c0_45 = arith.constant 0 : index
    %c0_46 = arith.constant 0 : index
    %82 = arith.index_cast %72 : i32 to index
    %83 = vector.load %arg7[%c3_44, %c0_45, %c0_46, %82] : memref<9x1x8x256xf32, #tpu.memory_space<vmem>>, vector<1x1x8x256xf32>
    %84 = vector.shape_cast %83 : vector<1x1x8x256xf32> to vector<8x256xf32>
    %c4_47 = arith.constant 4 : index
    %c0_48 = arith.constant 0 : index
    %c0_49 = arith.constant 0 : index
    %85 = arith.index_cast %72 : i32 to index
    %86 = vector.load %arg7[%c4_47, %c0_48, %c0_49, %85] : memref<9x1x8x256xf32, #tpu.memory_space<vmem>>, vector<1x1x8x256xf32>
    %87 = vector.shape_cast %86 : vector<1x1x8x256xf32> to vector<8x256xf32>
    %c5_50 = arith.constant 5 : index
    %c0_51 = arith.constant 0 : index
    %c0_52 = arith.constant 0 : index
    %88 = arith.index_cast %72 : i32 to index
    %89 = vector.load %arg7[%c5_50, %c0_51, %c0_52, %88] : memref<9x1x8x256xf32, #tpu.memory_space<vmem>>, vector<1x1x8x256xf32>
    %90 = vector.shape_cast %89 : vector<1x1x8x256xf32> to vector<8x256xf32>
    %c6_53 = arith.constant 6 : index
    %c0_54 = arith.constant 0 : index
    %c0_55 = arith.constant 0 : index
    %91 = arith.index_cast %72 : i32 to index
    %92 = vector.load %arg7[%c6_53, %c0_54, %c0_55, %91] : memref<9x1x8x256xf32, #tpu.memory_space<vmem>>, vector<1x1x8x256xf32>
    %93 = vector.shape_cast %92 : vector<1x1x8x256xf32> to vector<8x256xf32>
    %c7_56 = arith.constant 7 : index
    %c0_57 = arith.constant 0 : index
    %c0_58 = arith.constant 0 : index
    %94 = arith.index_cast %72 : i32 to index
    %95 = vector.load %arg7[%c7_56, %c0_57, %c0_58, %94] : memref<9x1x8x256xf32, #tpu.memory_space<vmem>>, vector<1x1x8x256xf32>
    %96 = vector.shape_cast %95 : vector<1x1x8x256xf32> to vector<8x256xf32>
    %c8_59 = arith.constant 8 : index
    %c0_60 = arith.constant 0 : index
    %c0_61 = arith.constant 0 : index
    %97 = arith.index_cast %72 : i32 to index
    %98 = vector.load %arg7[%c8_59, %c0_60, %c0_61, %97] : memref<9x1x8x256xf32, #tpu.memory_space<vmem>>, vector<1x1x8x256xf32>
    %99 = vector.shape_cast %98 : vector<1x1x8x256xf32> to vector<8x256xf32>
    %100 = vector.broadcast %0 : f32 to vector<8x256xf32>
    %101 = arith.mulf %75, %100 : vector<8x256xf32>
    %102 = vector.broadcast %4 : f32 to vector<8x256xf32>
    %103 = arith.mulf %78, %102 : vector<8x256xf32>
    %104 = arith.addf %101, %103 : vector<8x256xf32>
    %105 = vector.broadcast %8 : f32 to vector<8x256xf32>
    %106 = arith.mulf %81, %105 : vector<8x256xf32>
    %107 = arith.addf %104, %106 : vector<8x256xf32>
    %108 = vector.broadcast %12 : f32 to vector<8x256xf32>
    %109 = arith.mulf %84, %108 : vector<8x256xf32>
    %110 = arith.addf %107, %109 : vector<8x256xf32>
    %111 = vector.broadcast %16 : f32 to vector<8x256xf32>
    %112 = arith.mulf %87, %111 : vector<8x256xf32>
    %113 = arith.addf %110, %112 : vector<8x256xf32>
    %114 = vector.broadcast %20 : f32 to vector<8x256xf32>
    %115 = arith.mulf %90, %114 : vector<8x256xf32>
    %116 = arith.addf %113, %115 : vector<8x256xf32>
    %117 = vector.broadcast %24 : f32 to vector<8x256xf32>
    %118 = arith.mulf %93, %117 : vector<8x256xf32>
    %119 = arith.addf %116, %118 : vector<8x256xf32>
    %120 = vector.broadcast %28 : f32 to vector<8x256xf32>
    %121 = arith.mulf %96, %120 : vector<8x256xf32>
    %122 = arith.addf %119, %121 : vector<8x256xf32>
    %123 = vector.broadcast %32 : f32 to vector<8x256xf32>
    %124 = arith.mulf %99, %123 : vector<8x256xf32>
    %125 = arith.addf %122, %124 : vector<8x256xf32>
    %126 = vector.broadcast %36 : f32 to vector<8x256xf32>
    %127 = arith.addf %125, %126 : vector<8x256xf32>
    %cst = arith.constant 0.00999999977 : f32
    %128 = vector.broadcast %cst : f32 to vector<8x256xf32>
    %129 = arith.mulf %128, %127 : vector<8x256xf32>
    %130 = arith.maximumf %127, %129 : vector<8x256xf32>
    %131 = vector.broadcast %1 : f32 to vector<8x256xf32>
    %132 = arith.mulf %75, %131 : vector<8x256xf32>
    %133 = vector.broadcast %5 : f32 to vector<8x256xf32>
    %134 = arith.mulf %78, %133 : vector<8x256xf32>
    %135 = arith.addf %132, %134 : vector<8x256xf32>
    %136 = vector.broadcast %9 : f32 to vector<8x256xf32>
    %137 = arith.mulf %81, %136 : vector<8x256xf32>
    %138 = arith.addf %135, %137 : vector<8x256xf32>
    %139 = vector.broadcast %13 : f32 to vector<8x256xf32>
    %140 = arith.mulf %84, %139 : vector<8x256xf32>
    %141 = arith.addf %138, %140 : vector<8x256xf32>
    %142 = vector.broadcast %17 : f32 to vector<8x256xf32>
    %143 = arith.mulf %87, %142 : vector<8x256xf32>
    %144 = arith.addf %141, %143 : vector<8x256xf32>
    %145 = vector.broadcast %21 : f32 to vector<8x256xf32>
    %146 = arith.mulf %90, %145 : vector<8x256xf32>
    %147 = arith.addf %144, %146 : vector<8x256xf32>
    %148 = vector.broadcast %25 : f32 to vector<8x256xf32>
    %149 = arith.mulf %93, %148 : vector<8x256xf32>
    %150 = arith.addf %147, %149 : vector<8x256xf32>
    %151 = vector.broadcast %29 : f32 to vector<8x256xf32>
    %152 = arith.mulf %96, %151 : vector<8x256xf32>
    %153 = arith.addf %150, %152 : vector<8x256xf32>
    %154 = vector.broadcast %33 : f32 to vector<8x256xf32>
    %155 = arith.mulf %99, %154 : vector<8x256xf32>
    %156 = arith.addf %153, %155 : vector<8x256xf32>
    %157 = vector.broadcast %37 : f32 to vector<8x256xf32>
    %158 = arith.addf %156, %157 : vector<8x256xf32>
    %cst_62 = arith.constant 0.00999999977 : f32
    %159 = vector.broadcast %cst_62 : f32 to vector<8x256xf32>
    %160 = arith.mulf %159, %158 : vector<8x256xf32>
    %161 = arith.maximumf %158, %160 : vector<8x256xf32>
    %162 = vector.broadcast %2 : f32 to vector<8x256xf32>
    %163 = arith.mulf %75, %162 : vector<8x256xf32>
    %164 = vector.broadcast %6 : f32 to vector<8x256xf32>
    %165 = arith.mulf %78, %164 : vector<8x256xf32>
    %166 = arith.addf %163, %165 : vector<8x256xf32>
    %167 = vector.broadcast %10 : f32 to vector<8x256xf32>
    %168 = arith.mulf %81, %167 : vector<8x256xf32>
    %169 = arith.addf %166, %168 : vector<8x256xf32>
    %170 = vector.broadcast %14 : f32 to vector<8x256xf32>
    %171 = arith.mulf %84, %170 : vector<8x256xf32>
    %172 = arith.addf %169, %171 : vector<8x256xf32>
    %173 = vector.broadcast %18 : f32 to vector<8x256xf32>
    %174 = arith.mulf %87, %173 : vector<8x256xf32>
    %175 = arith.addf %172, %174 : vector<8x256xf32>
    %176 = vector.broadcast %22 : f32 to vector<8x256xf32>
    %177 = arith.mulf %90, %176 : vector<8x256xf32>
    %178 = arith.addf %175, %177 : vector<8x256xf32>
    %179 = vector.broadcast %26 : f32 to vector<8x256xf32>
    %180 = arith.mulf %93, %179 : vector<8x256xf32>
    %181 = arith.addf %178, %180 : vector<8x256xf32>
    %182 = vector.broadcast %30 : f32 to vector<8x256xf32>
    %183 = arith.mulf %96, %182 : vector<8x256xf32>
    %184 = arith.addf %181, %183 : vector<8x256xf32>
    %185 = vector.broadcast %34 : f32 to vector<8x256xf32>
    %186 = arith.mulf %99, %185 : vector<8x256xf32>
    %187 = arith.addf %184, %186 : vector<8x256xf32>
    %188 = vector.broadcast %38 : f32 to vector<8x256xf32>
    %189 = arith.addf %187, %188 : vector<8x256xf32>
    %cst_63 = arith.constant 0.00999999977 : f32
    %190 = vector.broadcast %cst_63 : f32 to vector<8x256xf32>
    %191 = arith.mulf %190, %189 : vector<8x256xf32>
    %192 = arith.maximumf %189, %191 : vector<8x256xf32>
    %193 = vector.broadcast %3 : f32 to vector<8x256xf32>
    %194 = arith.mulf %75, %193 : vector<8x256xf32>
    %195 = vector.broadcast %7 : f32 to vector<8x256xf32>
    %196 = arith.mulf %78, %195 : vector<8x256xf32>
    %197 = arith.addf %194, %196 : vector<8x256xf32>
    %198 = vector.broadcast %11 : f32 to vector<8x256xf32>
    %199 = arith.mulf %81, %198 : vector<8x256xf32>
    %200 = arith.addf %197, %199 : vector<8x256xf32>
    %201 = vector.broadcast %15 : f32 to vector<8x256xf32>
    %202 = arith.mulf %84, %201 : vector<8x256xf32>
    %203 = arith.addf %200, %202 : vector<8x256xf32>
    %204 = vector.broadcast %19 : f32 to vector<8x256xf32>
    %205 = arith.mulf %87, %204 : vector<8x256xf32>
    %206 = arith.addf %203, %205 : vector<8x256xf32>
    %207 = vector.broadcast %23 : f32 to vector<8x256xf32>
    %208 = arith.mulf %90, %207 : vector<8x256xf32>
    %209 = arith.addf %206, %208 : vector<8x256xf32>
    %210 = vector.broadcast %27 : f32 to vector<8x256xf32>
    %211 = arith.mulf %93, %210 : vector<8x256xf32>
    %212 = arith.addf %209, %211 : vector<8x256xf32>
    %213 = vector.broadcast %31 : f32 to vector<8x256xf32>
    %214 = arith.mulf %96, %213 : vector<8x256xf32>
    %215 = arith.addf %212, %214 : vector<8x256xf32>
    %216 = vector.broadcast %35 : f32 to vector<8x256xf32>
    %217 = arith.mulf %99, %216 : vector<8x256xf32>
    %218 = arith.addf %215, %217 : vector<8x256xf32>
    %219 = vector.broadcast %39 : f32 to vector<8x256xf32>
    %220 = arith.addf %218, %219 : vector<8x256xf32>
    %cst_64 = arith.constant 0.00999999977 : f32
    %221 = vector.broadcast %cst_64 : f32 to vector<8x256xf32>
    %222 = arith.mulf %221, %220 : vector<8x256xf32>
    %223 = arith.maximumf %220, %222 : vector<8x256xf32>
    %224 = vector.broadcast %40 : f32 to vector<8x256xf32>
    %225 = arith.mulf %130, %224 : vector<8x256xf32>
    %226 = vector.broadcast %45 : f32 to vector<8x256xf32>
    %227 = arith.mulf %161, %226 : vector<8x256xf32>
    %228 = arith.addf %225, %227 : vector<8x256xf32>
    %229 = vector.broadcast %50 : f32 to vector<8x256xf32>
    %230 = arith.mulf %192, %229 : vector<8x256xf32>
    %231 = arith.addf %228, %230 : vector<8x256xf32>
    %232 = vector.broadcast %55 : f32 to vector<8x256xf32>
    %233 = arith.mulf %223, %232 : vector<8x256xf32>
    %234 = arith.addf %231, %233 : vector<8x256xf32>
    %235 = vector.broadcast %60 : f32 to vector<8x256xf32>
    %236 = arith.addf %234, %235 : vector<8x256xf32>
    %cst_65 = arith.constant 0.00999999977 : f32
    %237 = vector.broadcast %cst_65 : f32 to vector<8x256xf32>
    %238 = arith.mulf %237, %236 : vector<8x256xf32>
    %239 = arith.maximumf %236, %238 : vector<8x256xf32>
    %240 = vector.broadcast %41 : f32 to vector<8x256xf32>
    %241 = arith.mulf %130, %240 : vector<8x256xf32>
    %242 = vector.broadcast %46 : f32 to vector<8x256xf32>
    %243 = arith.mulf %161, %242 : vector<8x256xf32>
    %244 = arith.addf %241, %243 : vector<8x256xf32>
    %245 = vector.broadcast %51 : f32 to vector<8x256xf32>
    %246 = arith.mulf %192, %245 : vector<8x256xf32>
    %247 = arith.addf %244, %246 : vector<8x256xf32>
    %248 = vector.broadcast %56 : f32 to vector<8x256xf32>
    %249 = arith.mulf %223, %248 : vector<8x256xf32>
    %250 = arith.addf %247, %249 : vector<8x256xf32>
    %251 = vector.broadcast %61 : f32 to vector<8x256xf32>
    %252 = arith.addf %250, %251 : vector<8x256xf32>
    %cst_66 = arith.constant 0.00999999977 : f32
    %253 = vector.broadcast %cst_66 : f32 to vector<8x256xf32>
    %254 = arith.mulf %253, %252 : vector<8x256xf32>
    %255 = arith.maximumf %252, %254 : vector<8x256xf32>
    %256 = vector.broadcast %42 : f32 to vector<8x256xf32>
    %257 = arith.mulf %130, %256 : vector<8x256xf32>
    %258 = vector.broadcast %47 : f32 to vector<8x256xf32>
    %259 = arith.mulf %161, %258 : vector<8x256xf32>
    %260 = arith.addf %257, %259 : vector<8x256xf32>
    %261 = vector.broadcast %52 : f32 to vector<8x256xf32>
    %262 = arith.mulf %192, %261 : vector<8x256xf32>
    %263 = arith.addf %260, %262 : vector<8x256xf32>
    %264 = vector.broadcast %57 : f32 to vector<8x256xf32>
    %265 = arith.mulf %223, %264 : vector<8x256xf32>
    %266 = arith.addf %263, %265 : vector<8x256xf32>
    %267 = vector.broadcast %62 : f32 to vector<8x256xf32>
    %268 = arith.addf %266, %267 : vector<8x256xf32>
    %cst_67 = arith.constant 0.00999999977 : f32
    %269 = vector.broadcast %cst_67 : f32 to vector<8x256xf32>
    %270 = arith.mulf %269, %268 : vector<8x256xf32>
    %271 = arith.maximumf %268, %270 : vector<8x256xf32>
    %272 = vector.broadcast %43 : f32 to vector<8x256xf32>
    %273 = arith.mulf %130, %272 : vector<8x256xf32>
    %274 = vector.broadcast %48 : f32 to vector<8x256xf32>
    %275 = arith.mulf %161, %274 : vector<8x256xf32>
    %276 = arith.addf %273, %275 : vector<8x256xf32>
    %277 = vector.broadcast %53 : f32 to vector<8x256xf32>
    %278 = arith.mulf %192, %277 : vector<8x256xf32>
    %279 = arith.addf %276, %278 : vector<8x256xf32>
    %280 = vector.broadcast %58 : f32 to vector<8x256xf32>
    %281 = arith.mulf %223, %280 : vector<8x256xf32>
    %282 = arith.addf %279, %281 : vector<8x256xf32>
    %283 = vector.broadcast %63 : f32 to vector<8x256xf32>
    %284 = arith.addf %282, %283 : vector<8x256xf32>
    %cst_68 = arith.constant 0.00999999977 : f32
    %285 = vector.broadcast %cst_68 : f32 to vector<8x256xf32>
    %286 = arith.mulf %285, %284 : vector<8x256xf32>
    %287 = arith.maximumf %284, %286 : vector<8x256xf32>
    %288 = vector.broadcast %44 : f32 to vector<8x256xf32>
    %289 = arith.mulf %130, %288 : vector<8x256xf32>
    %290 = vector.broadcast %49 : f32 to vector<8x256xf32>
    %291 = arith.mulf %161, %290 : vector<8x256xf32>
    %292 = arith.addf %289, %291 : vector<8x256xf32>
    %293 = vector.broadcast %54 : f32 to vector<8x256xf32>
    %294 = arith.mulf %192, %293 : vector<8x256xf32>
    %295 = arith.addf %292, %294 : vector<8x256xf32>
    %296 = vector.broadcast %59 : f32 to vector<8x256xf32>
    %297 = arith.mulf %223, %296 : vector<8x256xf32>
    %298 = arith.addf %295, %297 : vector<8x256xf32>
    %299 = vector.broadcast %64 : f32 to vector<8x256xf32>
    %300 = arith.addf %298, %299 : vector<8x256xf32>
    %cst_69 = arith.constant 0.00999999977 : f32
    %301 = vector.broadcast %cst_69 : f32 to vector<8x256xf32>
    %302 = arith.mulf %301, %300 : vector<8x256xf32>
    %303 = arith.maximumf %300, %302 : vector<8x256xf32>
    %304 = vector.broadcast %65 : f32 to vector<8x256xf32>
    %305 = arith.mulf %239, %304 : vector<8x256xf32>
    %306 = vector.broadcast %66 : f32 to vector<8x256xf32>
    %307 = arith.mulf %255, %306 : vector<8x256xf32>
    %308 = arith.addf %305, %307 : vector<8x256xf32>
    %309 = vector.broadcast %67 : f32 to vector<8x256xf32>
    %310 = arith.mulf %271, %309 : vector<8x256xf32>
    %311 = arith.addf %308, %310 : vector<8x256xf32>
    %312 = vector.broadcast %68 : f32 to vector<8x256xf32>
    %313 = arith.mulf %287, %312 : vector<8x256xf32>
    %314 = arith.addf %311, %313 : vector<8x256xf32>
    %315 = vector.broadcast %69 : f32 to vector<8x256xf32>
    %316 = arith.mulf %303, %315 : vector<8x256xf32>
    %317 = arith.addf %314, %316 : vector<8x256xf32>
    %318 = vector.broadcast %70 : f32 to vector<8x256xf32>
    %319 = arith.addf %317, %318 : vector<8x256xf32>
    %c0_70 = arith.constant 0 : index
    %c0_71 = arith.constant 0 : index
    %c0_72 = arith.constant 0 : index
    %320 = arith.index_cast %72 : i32 to index
    %321 = vector.load %arg8[%c0_70, %c0_71, %c0_72, %320] : memref<1x1x8x256xf32, #tpu.memory_space<vmem>>, vector<1x1x8x256xf32>
    %322 = vector.shape_cast %321 : vector<1x1x8x256xf32> to vector<8x256xf32>
    %323 = vector.shape_cast %319 : vector<8x256xf32> to vector<1x1x8x256xf32>
    tpu.vector_store %arg8[%c0_70, %c0_71, %c0_72, %320], %323 {strides = array<i32>} : memref<1x1x8x256xf32, #tpu.memory_space<vmem>>, vector<1x1x8x256xf32>,
    %c1_i32 = arith.constant 1 : i32
    return
  }
  func.func @transform_0(%arg0: i32) -> i32 {
    %c0_i32 = arith.constant 0 : i32
    %c0_i32_0 = arith.constant 0 : i32
    return %c0_i32 : i32
  }
  func.func @transform_1(%arg0: i32) -> i32 {
    %c0_i32 = arith.constant 0 : i32
    %c0_i32_0 = arith.constant 0 : i32
    return %c0_i32 : i32
  }
  func.func @transform_2(%arg0: i32) -> i32 {
    %c0_i32 = arith.constant 0 : i32
    %c0_i32_0 = arith.constant 0 : i32
    return %c0_i32 : i32
  }
  func.func @transform_3(%arg0: i32) -> i32 {
    %c0_i32 = arith.constant 0 : i32
    %c0_i32_0 = arith.constant 0 : i32
    return %c0_i32 : i32
  }
  func.func @transform_4(%arg0: i32) -> i32 {
    %c0_i32 = arith.constant 0 : i32
    %c0_i32_0 = arith.constant 0 : i32
    return %c0_i32 : i32
  }
  func.func @transform_5(%arg0: i32) -> i32 {
    %c0_i32 = arith.constant 0 : i32
    %c0_i32_0 = arith.constant 0 : i32
    return %c0_i32 : i32
  }
  func.func @transform_6(%arg0: i32) -> (i32, i32, i32, i32) {
    %c0_i32 = arith.constant 0 : i32
    %c0_i32_0 = arith.constant 0 : i32
    %c0_i32_1 = arith.constant 0 : i32
    %c0_i32_2 = arith.constant 0 : i32
    return %c0_i32, %arg0, %c0_i32_0, %c0_i32_1 : i32, i32, i32, i32
  }
  func.func @transform_7(%arg0: i32) -> (i32, i32, i32, i32) {
    %c0_i32 = arith.constant 0 : i32
    %c0_i32_0 = arith.constant 0 : i32
    %c0_i32_1 = arith.constant 0 : i32
    %c0_i32_2 = arith.constant 0 : i32
    return %c0_i32, %arg0, %c0_i32_0, %c0_i32_1 : i32, i32, i32, i32
  }
}

</mosaic_0001>

<llo_original>
// kernel: tpu_custom_call.1
$region0: #{tpu_custom_call.1}
  #allocation0 [shape = 'u32[]', space=smem, size = 0x4, offset = 0x4, fixed_abs, tag = 'smem constant byte address 0x4 - core index']
  #allocation1 [shape = 'u32[144,128]{1,0:T(1,128)}', space=vmem, size = 0x12000, scoped, tag = 'internal scratch']
  #allocation2 [shape = 'f32[1]{0:T(128)S(6)}', space=smem, size = 0x200, scoped, tag = 'scoped memory for tpu_custom_call.1']
  %s0 = inlined_call_operand.vmem [shape: f32[36], index: 0, kind: input, shape index: {}]
  %s1 = inlined_call_operand.vmem [shape: f32[4], index: 1, kind: input, shape index: {}]
  %s2 = inlined_call_operand.vmem [shape: f32[20], index: 2, kind: input, shape index: {}]
  %s3 = inlined_call_operand.vmem [shape: f32[5], index: 3, kind: input, shape index: {}]
  %s4 = inlined_call_operand.vmem [shape: f32[5], index: 4, kind: input, shape index: {}]
  %s5 = inlined_call_operand.<no memory space> [shape: f32[1], index: 5, kind: input, shape index: {}]
  %s6 = inlined_call_operand.hbm [shape: f32[9,1,8,256], index: 6, kind: input, shape index: {}]
  %s7 = inlined_call_operand.hbm [shape: f32[1,1,8,256], index: 7, kind: output, shape index: {}]
  %s8 = sld [smem:[#allocation0]]
  $region62: #{tpu_custom_call.1} parent=0
    _
  %s10 = ssub.s32 1, %s8
  %s11 = scalar_select 0, %s10, %s8
  %12 = sst [smem:[#allocation2]] %s5
  $region1: #{tpu_custom_call.1} parent=0
    #allocation3 [shape = 'u8[512]{0}', space=smem, size = 0x200, scoped, tag = 'input window, operand 0, single buffered']
    #allocation4 [shape = 's32[1]{0}', space=sflag, size = 0x4, scoped, tag = 'scoped memory for tpu_custom_call.1']
    #allocation5 [shape = 's32[1]{0}', space=sflag, size = 0x4, scoped, tag = 'scoped memory for tpu_custom_call.1']
    #allocation6 [shape = 's32[1]{0}', space=sflag, size = 0x4, scoped, tag = 'scoped memory for tpu_custom_call.1']
    #allocation7 [shape = 'u8[512]{0}', space=smem, size = 0x200, scoped, tag = 'input window, operand 1, single buffered']
    #allocation8 [shape = 's32[1]{0}', space=sflag, size = 0x4, scoped, tag = 'scoped memory for tpu_custom_call.1']
    #allocation9 [shape = 'u8[512]{0}', space=smem, size = 0x200, scoped, tag = 'input window, operand 2, single buffered']
    #allocation10 [shape = 'u8[512]{0}', space=smem, size = 0x200, scoped, tag = 'input window, operand 3, single buffered']
    #allocation11 [shape = 's32[1]{0}', space=sflag, size = 0x4, scoped, tag = 'scoped memory for tpu_custom_call.1']
    #allocation12 [shape = 'u8[512]{0}', space=smem, size = 0x200, scoped, tag = 'input window, operand 4, single buffered']
    #allocation13 [shape = 'u8[73728]{0}', space=vmem, size = 0x12000, scoped, tag = 'input window, operand 6, single buffered']
    #allocation14 [shape = 'u8[8192]{0}', space=vmem, size = 0x2000, scoped, tag = 'output window, operand 0, single buffered']
    %13 = vsyncpa [#allocation6], 0
    %14 = vsyncpa [#allocation8], 0
    %15 = vsyncpa [#allocation11], 0
    %16 = vsyncpa [#allocation4], 0
    %17 = vsyncpa [#allocation5], 0
    // Predicated region
    $region2: #{tpu_custom_call.1} parent=1 // pred_check
      _
    $region3: #{tpu_custom_call.1} parent=1 // pred_check_branch
      %19 = sbr.rel (0) target = $region5
    $region4: #{tpu_custom_call.1} parent=1 // pred_region
      %s21 = ssub.s32 16, 16
      %22 = vsyncadd [#allocation6], %s21
      %s24 = sshll.u32 %s0, 4
      %s25 = int_to_ptr.vmem [resolvable:$true] %s24
      %27 = dma.vmem_to_smem %s25, 16, [#allocation3], [#allocation6]
    $region5: #{tpu_custom_call.1} parent=1 // pred_fallthru
      _
    // Predicated region
    $region6: #{tpu_custom_call.1} parent=1 // pred_check
      _
    $region7: #{tpu_custom_call.1} parent=1 // pred_check_branch
      %29 = sbr.rel (0) target = $region9
    $region8: #{tpu_custom_call.1} parent=1 // pred_region
      %s31 = ssub.s32 16, 16
      %32 = vsyncadd [#allocation8], %s31
      %s34 = sshll.u32 %s1, 4
      %s35 = int_to_ptr.vmem [resolvable:$true] %s34
      %37 = dma.vmem_to_smem %s35, 16, [#allocation7], [#allocation8]
    $region9: #{tpu_custom_call.1} parent=1 // pred_fallthru
      _
    // Predicated region
    $region10: #{tpu_custom_call.1} parent=1 // pred_check
      _
    $region11: #{tpu_custom_call.1} parent=1 // pred_check_branch
      %39 = sbr.rel (0) target = $region13
    $region12: #{tpu_custom_call.1} parent=1 // pred_region
      %s41 = ssub.s32 16, 16
      %42 = vsyncadd [#allocation8], %s41
      %s44 = sshll.u32 %s2, 4
      %s45 = int_to_ptr.vmem [resolvable:$true] %s44
      %47 = dma.vmem_to_smem %s45, 16, [#allocation9], [#allocation8]
    $region13: #{tpu_custom_call.1} parent=1 // pred_fallthru
      _
    // Predicated region
    $region14: #{tpu_custom_call.1} parent=1 // pred_check
      _
    $region15: #{tpu_custom_call.1} parent=1 // pred_check_branch
      %49 = sbr.rel (0) target = $region17
    $region16: #{tpu_custom_call.1} parent=1 // pred_region
      %s51 = ssub.s32 16, 16
      %52 = vsyncadd [#allocation11], %s51
      %s54 = sshll.u32 %s3, 4
      %s55 = int_to_ptr.vmem [resolvable:$true] %s54
      %57 = dma.vmem_to_smem %s55, 16, [#allocation10], [#allocation11]
    $region17: #{tpu_custom_call.1} parent=1 // pred_fallthru
      _
    // Predicated region
    $region18: #{tpu_custom_call.1} parent=1 // pred_check
      _
    $region19: #{tpu_custom_call.1} parent=1 // pred_check_branch
      %59 = sbr.rel (0) target = $region21
    $region20: #{tpu_custom_call.1} parent=1 // pred_region
      %s61 = ssub.s32 16, 16
      %62 = vsyncadd [#allocation11], %s61
      %s64 = sshll.u32 %s4, 4
      %s65 = int_to_ptr.vmem [resolvable:$true] %s64
      %67 = dma.vmem_to_smem %s65, 16, [#allocation12], [#allocation11]
    $region21: #{tpu_custom_call.1} parent=1 // pred_fallthru
      _
    // Predicated region
    $region22: #{tpu_custom_call.1} parent=1 // pred_check
      _
    $region23: #{tpu_custom_call.1} parent=1 // pred_check_branch
      %69 = sbr.rel (0) target = $region25
    $region24: #{tpu_custom_call.1} parent=1 // pred_region
      _
    $region25: #{tpu_custom_call.1} parent=1 // pred_fallthru
      _
    // Predicated region
    $region26: #{tpu_custom_call.1} parent=1 // pred_check
      _
    $region27: #{tpu_custom_call.1} parent=1 // pred_check_branch
      %71 = sbr.rel (0) target = $region29
    $region28: #{tpu_custom_call.1} parent=1 // pred_region
      %s73 = ssub.s32 2304, 2304
      %74 = vsyncadd [#allocation4], %s73
      %s75 = sshll.u32 [#allocation13], 4
      %s76 = int_to_ptr.vmem [resolvable:$true] %s75
      %81 = dma.hbm_to_vmem [thread:$0]  %s6, 2304, %s76, [#allocation4], 256, 256, 16
    $region29: #{tpu_custom_call.1} parent=1 // pred_fallthru
      _
    // Predicated region
    $region30: #{tpu_custom_call.1} parent=1 // pred_check
      _
    $region31: #{tpu_custom_call.1} parent=1 // pred_check_branch
      %83 = sbr.rel (0) target = $region33
    $region32: #{tpu_custom_call.1} parent=1 // pred_region
      %84 = dma.done [#allocation6], 16
    $region33: #{tpu_custom_call.1} parent=1 // pred_fallthru
      _
    // Predicated region
    $region34: #{tpu_custom_call.1} parent=1 // pred_check
      _
    $region35: #{tpu_custom_call.1} parent=1 // pred_check_branch
      %86 = sbr.rel (0) target = $region37
    $region36: #{tpu_custom_call.1} parent=1 // pred_region
      %87 = dma.done [#allocation8], 16
    $region37: #{tpu_custom_call.1} parent=1 // pred_fallthru
      _
    // Predicated region
    $region38: #{tpu_custom_call.1} parent=1 // pred_check
      _
    $region39: #{tpu_custom_call.1} parent=1 // pred_check_branch
      %89 = sbr.rel (0) target = $region41
    $region40: #{tpu_custom_call.1} parent=1 // pred_region
      %90 = dma.done [#allocation8], 16
    $region41: #{tpu_custom_call.1} parent=1 // pred_fallthru
      _
    // Predicated region
    $region42: #{tpu_custom_call.1} parent=1 // pred_check
      _
    $region43: #{tpu_custom_call.1} parent=1 // pred_check_branch
      %92 = sbr.rel (0) target = $region45
    $region44: #{tpu_custom_call.1} parent=1 // pred_region
      %93 = dma.done [#allocation11], 16
    $region45: #{tpu_custom_call.1} parent=1 // pred_fallthru
      _
    // Predicated region
    $region46: #{tpu_custom_call.1} parent=1 // pred_check
      _
    $region47: #{tpu_custom_call.1} parent=1 // pred_check_branch
      %95 = sbr.rel (0) target = $region49
    $region48: #{tpu_custom_call.1} parent=1 // pred_region
      %96 = dma.done [#allocation11], 16
    $region49: #{tpu_custom_call.1} parent=1 // pred_fallthru
      _
    // Predicated region
    $region50: #{tpu_custom_call.1} parent=1 // pred_check
      _
    $region51: #{tpu_custom_call.1} parent=1 // pred_check_branch
      %98 = sbr.rel (0) target = $region53
    $region52: #{tpu_custom_call.1} parent=1 // pred_region
      %99 = dma.done [#allocation4], 2304
    $region53: #{tpu_custom_call.1} parent=1 // pred_fallthru
      _
    %100 = sfence
    %s101 = sld [smem:[#allocation3]]
    %s102 = sld [smem:[#allocation3 + $0x1]]
    %s103 = sld [smem:[#allocation3 + $0x2]]
    %s104 = sld [smem:[#allocation3 + $0x3]]
    %s105 = sld [smem:[#allocation3 + $0x4]]
    %s106 = sld [smem:[#allocation3 + $0x5]]
    %s107 = sld [smem:[#allocation3 + $0x6]]
    %s108 = sld [smem:[#allocation3 + $0x7]]
    %s109 = sld [smem:[#allocation3 + $0x8]]
    %s110 = sld [smem:[#allocation3 + $0x9]]
    %s111 = sld [smem:[#allocation3 + $0xa]]
    %s112 = sld [smem:[#allocation3 + $0xb]]
    %s113 = sld [smem:[#allocation3 + $0xc]]
    %s114 = sld [smem:[#allocation3 + $0xd]]
    %s115 = sld [smem:[#allocation3 + $0xe]]
    %s116 = sld [smem:[#allocation3 + $0xf]]
    %s117 = sld [smem:[#allocation3 + $0x10]]
    %s118 = sld [smem:[#allocation3 + $0x11]]
    %s119 = sld [smem:[#allocation3 + $0x12]]
    %s120 = sld [smem:[#allocation3 + $0x13]]
    %s121 = sld [smem:[#allocation3 + $0x14]]
    %s122 = sld [smem:[#allocation3 + $0x15]]
    %s123 = sld [smem:[#allocation3 + $0x16]]
    %s124 = sld [smem:[#allocation3 + $0x17]]
    %s125 = sld [smem:[#allocation3 + $0x18]]
    %s126 = sld [smem:[#allocation3 + $0x19]]
    %s127 = sld [smem:[#allocation3 + $0x1a]]
    %s128 = sld [smem:[#allocation3 + $0x1b]]
    %s129 = sld [smem:[#allocation3 + $0x1c]]
    %s130 = sld [smem:[#allocation3 + $0x1d]]
    %s131 = sld [smem:[#allocation3 + $0x1e]]
    %s132 = sld [smem:[#allocation3 + $0x1f]]
    %s133 = sld [smem:[#allocation3 + $0x20]]
    %s134 = sld [smem:[#allocation3 + $0x21]]
    %s135 = sld [smem:[#allocation3 + $0x22]]
    %s136 = sld [smem:[#allocation3 + $0x23]]
    %s137 = sld [smem:[#allocation7]]
    %s138 = sld [smem:[#allocation7 + $0x1]]
    %s139 = sld [smem:[#allocation7 + $0x2]]
    %s140 = sld [smem:[#allocation7 + $0x3]]
    %s141 = sld [smem:[#allocation9]]
    %s142 = sld [smem:[#allocation9 + $0x1]]
    %s143 = sld [smem:[#allocation9 + $0x2]]
    %s144 = sld [smem:[#allocation9 + $0x3]]
    %s145 = sld [smem:[#allocation9 + $0x4]]
    %s146 = sld [smem:[#allocation9 + $0x5]]
    %s147 = sld [smem:[#allocation9 + $0x6]]
    %s148 = sld [smem:[#allocation9 + $0x7]]
    %s149 = sld [smem:[#allocation9 + $0x8]]
    %s150 = sld [smem:[#allocation9 + $0x9]]
    %s151 = sld [smem:[#allocation9 + $0xa]]
    %s152 = sld [smem:[#allocation9 + $0xb]]
    %s153 = sld [smem:[#allocation9 + $0xc]]
    %s154 = sld [smem:[#allocation9 + $0xd]]
    %s155 = sld [smem:[#allocation9 + $0xe]]
    %s156 = sld [smem:[#allocation9 + $0xf]]
    %s157 = sld [smem:[#allocation9 + $0x10]]
    %s158 = sld [smem:[#allocation9 + $0x11]]
    %s159 = sld [smem:[#allocation9 + $0x12]]
    %s160 = sld [smem:[#allocation9 + $0x13]]
    %s161 = sld [smem:[#allocation10]]
    %s162 = sld [smem:[#allocation10 + $0x1]]
    %s163 = sld [smem:[#allocation10 + $0x2]]
    %s164 = sld [smem:[#allocation10 + $0x3]]
    %s165 = sld [smem:[#allocation10 + $0x4]]
    %s166 = sld [smem:[#allocation12]]
    %s167 = sld [smem:[#allocation12 + $0x1]]
    %s168 = sld [smem:[#allocation12 + $0x2]]
    %s169 = sld [smem:[#allocation12 + $0x3]]
    %s170 = sld [smem:[#allocation12 + $0x4]]
    %s171 = sld [smem:[#allocation2]]
    %v172 = vld [vmem:[#allocation13] sm:$0xff]
    %v173 = vld [vmem:[#allocation13 + $0x8] sm:$0xff]
    %s174 = sadd.s32 0, 2
    %s175 = smul.addr %s174, 8
    %s176 = scalar_lea.vmem [#allocation13], %s175
    %v177 = vld [vmem:[%s176] sm:$0xff]
    %v178 = vld [vmem:[%s176 + $0x8] sm:$0xff]
    %s179 = sadd.s32 0, 4
    %s180 = smul.addr %s179, 8
    %s181 = scalar_lea.vmem [#allocation13], %s180
    %v182 = vld [vmem:[%s181] sm:$0xff]
    %v183 = vld [vmem:[%s181 + $0x8] sm:$0xff]
    %s184 = sadd.s32 0, 6
    %s185 = smul.addr %s184, 8
    %s186 = scalar_lea.vmem [#allocation13], %s185
    %v187 = vld [vmem:[%s186] sm:$0xff]
    %v188 = vld [vmem:[%s186 + $0x8] sm:$0xff]
    %s189 = sadd.s32 0, 8
    %s190 = smul.addr %s189, 8
    %s191 = scalar_lea.vmem [#allocation13], %s190
    %v192 = vld [vmem:[%s191] sm:$0xff]
    %v193 = vld [vmem:[%s191 + $0x8] sm:$0xff]
    %s194 = sadd.s32 0, 10
    %s195 = smul.addr %s194, 8
    %s196 = scalar_lea.vmem [#allocation13], %s195
    %v197 = vld [vmem:[%s196] sm:$0xff]
    %v198 = vld [vmem:[%s196 + $0x8] sm:$0xff]
    %s199 = sadd.s32 0, 12
    %s200 = smul.addr %s199, 8
    %s201 = scalar_lea.vmem [#allocation13], %s200
    %v202 = vld [vmem:[%s201] sm:$0xff]
    %v203 = vld [vmem:[%s201 + $0x8] sm:$0xff]
    %s204 = sadd.s32 0, 14
    %s205 = smul.addr %s204, 8
    %s206 = scalar_lea.vmem [#allocation13], %s205
    %v207 = vld [vmem:[%s206] sm:$0xff]
    %v208 = vld [vmem:[%s206 + $0x8] sm:$0xff]
    %s209 = sadd.s32 0, 16
    %s210 = smul.addr %s209, 8
    %s211 = scalar_lea.vmem [#allocation13], %s210
    %v212 = vld [vmem:[%s211] sm:$0xff]
    %v213 = vld [vmem:[%s211 + $0x8] sm:$0xff]
    %v214 = vstv %s101
    %v215 = vmul.f32 %v172, %v214
    %v216 = vmul.f32 %v173, %v214
    %v217 = vstv %s105
    %v218 = vmul.f32 %v177, %v217
    %v219 = vmul.f32 %v178, %v217
    %v220 = vadd.f32 %v215, %v218
    %v221 = vadd.f32 %v216, %v219
    %v222 = vstv %s109
    %v223 = vmul.f32 %v182, %v222
    %v224 = vmul.f32 %v183, %v222
    %v225 = vadd.f32 %v220, %v223
    %v226 = vadd.f32 %v221, %v224
    %v227 = vstv %s113
    %v228 = vmul.f32 %v187, %v227
    %v229 = vmul.f32 %v188, %v227
    %v230 = vadd.f32 %v225, %v228
    %v231 = vadd.f32 %v226, %v229
    %v232 = vstv %s117
    %v233 = vmul.f32 %v192, %v232
    %v234 = vmul.f32 %v193, %v232
    %v235 = vadd.f32 %v230, %v233
    %v236 = vadd.f32 %v231, %v234
    %v237 = vstv %s121
    %v238 = vmul.f32 %v197, %v237
    %v239 = vmul.f32 %v198, %v237
    %v240 = vadd.f32 %v235, %v238
    %v241 = vadd.f32 %v236, %v239
    %v242 = vstv %s125
    %v243 = vmul.f32 %v202, %v242
    %v244 = vmul.f32 %v203, %v242
    %v245 = vadd.f32 %v240, %v243
    %v246 = vadd.f32 %v241, %v244
    %v247 = vstv %s129
    %v248 = vmul.f32 %v207, %v247
    %v249 = vmul.f32 %v208, %v247
    %v250 = vadd.f32 %v245, %v248
    %v251 = vadd.f32 %v246, %v249
    %v252 = vstv %s133
    %v253 = vmul.f32 %v212, %v252
    %v254 = vmul.f32 %v213, %v252
    %v255 = vadd.f32 %v250, %v253
    %v256 = vadd.f32 %v251, %v254
    %v257 = vstv %s137
    %v258 = vadd.f32 %v255, %v257
    %v259 = vadd.f32 %v256, %v257
    %v260 = vmul.f32 %v258, 0.01
    %v261 = vmul.f32 %v259, 0.01
    %v262 = vmax.f32 %v258, %v260
    %v263 = vmax.f32 %v259, %v261
    %v264 = vstv %s102
    %v265 = vmul.f32 %v172, %v264
    %v266 = vmul.f32 %v173, %v264
    %v267 = vstv %s106
    %v268 = vmul.f32 %v177, %v267
    %v269 = vmul.f32 %v178, %v267
    %v270 = vadd.f32 %v265, %v268
    %v271 = vadd.f32 %v266, %v269
    %v272 = vstv %s110
    %v273 = vmul.f32 %v182, %v272
    %v274 = vmul.f32 %v183, %v272
    %v275 = vadd.f32 %v270, %v273
    %v276 = vadd.f32 %v271, %v274
    %v277 = vstv %s114
    %v278 = vmul.f32 %v187, %v277
    %v279 = vmul.f32 %v188, %v277
    %v280 = vadd.f32 %v275, %v278
    %v281 = vadd.f32 %v276, %v279
    %v282 = vstv %s118
    %v283 = vmul.f32 %v192, %v282
    %v284 = vmul.f32 %v193, %v282
    %v285 = vadd.f32 %v280, %v283
    %v286 = vadd.f32 %v281, %v284
    %v287 = vstv %s122
    %v288 = vmul.f32 %v197, %v287
    %v289 = vmul.f32 %v198, %v287
    %v290 = vadd.f32 %v285, %v288
    %v291 = vadd.f32 %v286, %v289
    %v292 = vstv %s126
    %v293 = vmul.f32 %v202, %v292
    %v294 = vmul.f32 %v203, %v292
    %v295 = vadd.f32 %v290, %v293
    %v296 = vadd.f32 %v291, %v294
    %v297 = vstv %s130
    %v298 = vmul.f32 %v207, %v297
    %v299 = vmul.f32 %v208, %v297
    %v300 = vadd.f32 %v295, %v298
    %v301 = vadd.f32 %v296, %v299
    %v302 = vstv %s134
    %v303 = vmul.f32 %v212, %v302
    %v304 = vmul.f32 %v213, %v302
    %v305 = vadd.f32 %v300, %v303
    %v306 = vadd.f32 %v301, %v304
    %v307 = vstv %s138
    %v308 = vadd.f32 %v305, %v307
    %v309 = vadd.f32 %v306, %v307
    %v310 = vmul.f32 %v308, 0.01
    %v311 = vmul.f32 %v309, 0.01
    %v312 = vmax.f32 %v308, %v310
    %v313 = vmax.f32 %v309, %v311
    %v314 = vstv %s103
    %v315 = vmul.f32 %v172, %v314
    %v316 = vmul.f32 %v173, %v314
    %v317 = vstv %s107
    %v318 = vmul.f32 %v177, %v317
    %v319 = vmul.f32 %v178, %v317
    %v320 = vadd.f32 %v315, %v318
    %v321 = vadd.f32 %v316, %v319
    %v322 = vstv %s111
    %v323 = vmul.f32 %v182, %v322
    %v324 = vmul.f32 %v183, %v322
    %v325 = vadd.f32 %v320, %v323
    %v326 = vadd.f32 %v321, %v324
    %v327 = vstv %s115
    %v328 = vmul.f32 %v187, %v327
    %v329 = vmul.f32 %v188, %v327
    %v330 = vadd.f32 %v325, %v328
    %v331 = vadd.f32 %v326, %v329
    %v332 = vstv %s119
    %v333 = vmul.f32 %v192, %v332
    %v334 = vmul.f32 %v193, %v332
    %v335 = vadd.f32 %v330, %v333
    %v336 = vadd.f32 %v331, %v334
    %v337 = vstv %s123
    %v338 = vmul.f32 %v197, %v337
    %v339 = vmul.f32 %v198, %v337
    %v340 = vadd.f32 %v335, %v338
    %v341 = vadd.f32 %v336, %v339
    %v342 = vstv %s127
    %v343 = vmul.f32 %v202, %v342
    %v344 = vmul.f32 %v203, %v342
    %v345 = vadd.f32 %v340, %v343
    %v346 = vadd.f32 %v341, %v344
    %v347 = vstv %s131
    %v348 = vmul.f32 %v207, %v347
    %v349 = vmul.f32 %v208, %v347
    %v350 = vadd.f32 %v345, %v348
    %v351 = vadd.f32 %v346, %v349
    %v352 = vstv %s135
    %v353 = vmul.f32 %v212, %v352
    %v354 = vmul.f32 %v213, %v352
    %v355 = vadd.f32 %v350, %v353
    %v356 = vadd.f32 %v351, %v354
    %v357 = vstv %s139
    %v358 = vadd.f32 %v355, %v357
    %v359 = vadd.f32 %v356, %v357
    %v360 = vmul.f32 %v358, 0.01
    %v361 = vmul.f32 %v359, 0.01
    %v362 = vmax.f32 %v358, %v360
    %v363 = vmax.f32 %v359, %v361
    %v364 = vstv %s104
    %v365 = vmul.f32 %v172, %v364
    %v366 = vmul.f32 %v173, %v364
    %v367 = vstv %s108
    %v368 = vmul.f32 %v177, %v367
    %v369 = vmul.f32 %v178, %v367
    %v370 = vadd.f32 %v365, %v368
    %v371 = vadd.f32 %v366, %v369
    %v372 = vstv %s112
    %v373 = vmul.f32 %v182, %v372
    %v374 = vmul.f32 %v183, %v372
    %v375 = vadd.f32 %v370, %v373
    %v376 = vadd.f32 %v371, %v374
    %v377 = vstv %s116
    %v378 = vmul.f32 %v187, %v377
    %v379 = vmul.f32 %v188, %v377
    %v380 = vadd.f32 %v375, %v378
    %v381 = vadd.f32 %v376, %v379
    %v382 = vstv %s120
    %v383 = vmul.f32 %v192, %v382
    %v384 = vmul.f32 %v193, %v382
    %v385 = vadd.f32 %v380, %v383
    %v386 = vadd.f32 %v381, %v384
    %v387 = vstv %s124
    %v388 = vmul.f32 %v197, %v387
    %v389 = vmul.f32 %v198, %v387
    %v390 = vadd.f32 %v385, %v388
    %v391 = vadd.f32 %v386, %v389
    %v392 = vstv %s128
    %v393 = vmul.f32 %v202, %v392
    %v394 = vmul.f32 %v203, %v392
    %v395 = vadd.f32 %v390, %v393
    %v396 = vadd.f32 %v391, %v394
    %v397 = vstv %s132
    %v398 = vmul.f32 %v207, %v397
    %v399 = vmul.f32 %v208, %v397
    %v400 = vadd.f32 %v395, %v398
    %v401 = vadd.f32 %v396, %v399
    %v402 = vstv %s136
    %v403 = vmul.f32 %v212, %v402
    %v404 = vmul.f32 %v213, %v402
    %v405 = vadd.f32 %v400, %v403
    %v406 = vadd.f32 %v401, %v404
    %v407 = vstv %s140
    %v408 = vadd.f32 %v405, %v407
    %v409 = vadd.f32 %v406, %v407
    %v410 = vmul.f32 %v408, 0.01
    %v411 = vmul.f32 %v409, 0.01
    %v412 = vmax.f32 %v408, %v410
    %v413 = vmax.f32 %v409, %v411
    %v414 = vstv %s141
    %v415 = vmul.f32 %v262, %v414
    %v416 = vmul.f32 %v263, %v414
    %v417 = vstv %s146
    %v418 = vmul.f32 %v312, %v417
    %v419 = vmul.f32 %v313, %v417
    %v420 = vadd.f32 %v415, %v418
    %v421 = vadd.f32 %v416, %v419
    %v422 = vstv %s151
    %v423 = vmul.f32 %v362, %v422
    %v424 = vmul.f32 %v363, %v422
    %v425 = vadd.f32 %v420, %v423
    %v426 = vadd.f32 %v421, %v424
    %v427 = vstv %s156
    %v428 = vmul.f32 %v412, %v427
    %v429 = vmul.f32 %v413, %v427
    %v430 = vadd.f32 %v425, %v428
    %v431 = vadd.f32 %v426, %v429
    %v432 = vstv %s161
    %v433 = vadd.f32 %v430, %v432
    %v434 = vadd.f32 %v431, %v432
    %v435 = vmul.f32 %v433, 0.01
    %v436 = vmul.f32 %v434, 0.01
    %v437 = vmax.f32 %v433, %v435
    %v438 = vmax.f32 %v434, %v436
    %v439 = vstv %s142
    %v440 = vmul.f32 %v262, %v439
    %v441 = vmul.f32 %v263, %v439
    %v442 = vstv %s147
    %v443 = vmul.f32 %v312, %v442
    %v444 = vmul.f32 %v313, %v442
    %v445 = vadd.f32 %v440, %v443
    %v446 = vadd.f32 %v441, %v444
    %v447 = vstv %s152
    %v448 = vmul.f32 %v362, %v447
    %v449 = vmul.f32 %v363, %v447
    %v450 = vadd.f32 %v445, %v448
    %v451 = vadd.f32 %v446, %v449
    %v452 = vstv %s157
    %v453 = vmul.f32 %v412, %v452
    %v454 = vmul.f32 %v413, %v452
    %v455 = vadd.f32 %v450, %v453
    %v456 = vadd.f32 %v451, %v454
    %v457 = vstv %s162
    %v458 = vadd.f32 %v455, %v457
    %v459 = vadd.f32 %v456, %v457
    %v460 = vmul.f32 %v458, 0.01
    %v461 = vmul.f32 %v459, 0.01
    %v462 = vmax.f32 %v458, %v460
    %v463 = vmax.f32 %v459, %v461
    %v464 = vstv %s143
    %v465 = vmul.f32 %v262, %v464
    %v466 = vmul.f32 %v263, %v464
    %v467 = vstv %s148
    %v468 = vmul.f32 %v312, %v467
    %v469 = vmul.f32 %v313, %v467
    %v470 = vadd.f32 %v465, %v468
    %v471 = vadd.f32 %v466, %v469
    %v472 = vstv %s153
    %v473 = vmul.f32 %v362, %v472
    %v474 = vmul.f32 %v363, %v472
    %v475 = vadd.f32 %v470, %v473
    %v476 = vadd.f32 %v471, %v474
    %v477 = vstv %s158
    %v478 = vmul.f32 %v412, %v477
    %v479 = vmul.f32 %v413, %v477
    %v480 = vadd.f32 %v475, %v478
    %v481 = vadd.f32 %v476, %v479
    %v482 = vstv %s163
    %v483 = vadd.f32 %v480, %v482
    %v484 = vadd.f32 %v481, %v482
    %v485 = vmul.f32 %v483, 0.01
    %v486 = vmul.f32 %v484, 0.01
    %v487 = vmax.f32 %v483, %v485
    %v488 = vmax.f32 %v484, %v486
    %v489 = vstv %s144
    %v490 = vmul.f32 %v262, %v489
    %v491 = vmul.f32 %v263, %v489
    %v492 = vstv %s149
    %v493 = vmul.f32 %v312, %v492
    %v494 = vmul.f32 %v313, %v492
    %v495 = vadd.f32 %v490, %v493
    %v496 = vadd.f32 %v491, %v494
    %v497 = vstv %s154
    %v498 = vmul.f32 %v362, %v497
    %v499 = vmul.f32 %v363, %v497
    %v500 = vadd.f32 %v495, %v498
    %v501 = vadd.f32 %v496, %v499
    %v502 = vstv %s159
    %v503 = vmul.f32 %v412, %v502
    %v504 = vmul.f32 %v413, %v502
    %v505 = vadd.f32 %v500, %v503
    %v506 = vadd.f32 %v501, %v504
    %v507 = vstv %s164
    %v508 = vadd.f32 %v505, %v507
    %v509 = vadd.f32 %v506, %v507
    %v510 = vmul.f32 %v508, 0.01
    %v511 = vmul.f32 %v509, 0.01
    %v512 = vmax.f32 %v508, %v510
    %v513 = vmax.f32 %v509, %v511
    %v514 = vstv %s145
    %v515 = vmul.f32 %v262, %v514
    %v516 = vmul.f32 %v263, %v514
    %v517 = vstv %s150
    %v518 = vmul.f32 %v312, %v517
    %v519 = vmul.f32 %v313, %v517
    %v520 = vadd.f32 %v515, %v518
    %v521 = vadd.f32 %v516, %v519
    %v522 = vstv %s155
    %v523 = vmul.f32 %v362, %v522
    %v524 = vmul.f32 %v363, %v522
    %v525 = vadd.f32 %v520, %v523
    %v526 = vadd.f32 %v521, %v524
    %v527 = vstv %s160
    %v528 = vmul.f32 %v412, %v527
    %v529 = vmul.f32 %v413, %v527
    %v530 = vadd.f32 %v525, %v528
    %v531 = vadd.f32 %v526, %v529
    %v532 = vstv %s165
    %v533 = vadd.f32 %v530, %v532
    %v534 = vadd.f32 %v531, %v532
    %v535 = vmul.f32 %v533, 0.01
    %v536 = vmul.f32 %v534, 0.01
    %v537 = vmax.f32 %v533, %v535
    %v538 = vmax.f32 %v534, %v536
    %v539 = vstv %s166
    %v540 = vmul.f32 %v437, %v539
    %v541 = vmul.f32 %v438, %v539
    %v542 = vstv %s167
    %v543 = vmul.f32 %v462, %v542
    %v544 = vmul.f32 %v463, %v542
    %v545 = vadd.f32 %v540, %v543
    %v546 = vadd.f32 %v541, %v544
    %v547 = vstv %s168
    %v548 = vmul.f32 %v487, %v547
    %v549 = vmul.f32 %v488, %v547
    %v550 = vadd.f32 %v545, %v548
    %v551 = vadd.f32 %v546, %v549
    %v552 = vstv %s169
    %v553 = vmul.f32 %v512, %v552
    %v554 = vmul.f32 %v513, %v552
    %v555 = vadd.f32 %v550, %v553
    %v556 = vadd.f32 %v551, %v554
    %v557 = vstv %s170
    %v558 = vmul.f32 %v537, %v557
    %v559 = vmul.f32 %v538, %v557
    %v560 = vadd.f32 %v555, %v558
    %v561 = vadd.f32 %v556, %v559
    %v562 = vstv %s171
    %v563 = vadd.f32 %v560, %v562
    %v564 = vadd.f32 %v561, %v562
    %565 = vst [vmem:[#allocation14] sm:$0xff] %v563
    %566 = vst [vmem:[#allocation14 + $0x8] sm:$0xff] %v564
    // Predicated region
    $region54: #{tpu_custom_call.1} parent=1 // pred_check
      _
    $region55: #{tpu_custom_call.1} parent=1 // pred_check_branch
      %568 = sbr.rel (0) target = $region57
    $region56: #{tpu_custom_call.1} parent=1 // pred_region
      %s570 = ssub.s32 256, 256
      %571 = vsyncadd [#allocation5], %s570
      %s573 = sshll.u32 [#allocation14], 4
      %s574 = int_to_ptr.vmem [resolvable:$true] %s573
      %576 = dma.vmem_to_hbm [thread:$0]  %s574, 256, %s7, [#allocation5]
    $region57: #{tpu_custom_call.1} parent=1 // pred_fallthru
      _
    // Predicated region
    $region58: #{tpu_custom_call.1} parent=1 // pred_check
      _
    $region59: #{tpu_custom_call.1} parent=1 // pred_check_branch
      %578 = sbr.rel (0) target = $region61
    $region60: #{tpu_custom_call.1} parent=1 // pred_region
      %579 = dma.done [#allocation5], 256
    $region61: #{tpu_custom_call.1} parent=1 // pred_fallthru
      _
    %580 = vsyncpa [#allocation4], 1
    %581 = vsyncpa [#allocation5], 1
    %582 = vsyncpa [#allocation6], 1
    %583 = vsyncpa [#allocation8], 1
    %584 = vsyncpa [#allocation11], 1

</llo_original>
